<compile_context>
chip_gen: v7x
topology: tpu7x:2x2x1
jax: 0.10.0
libtpu: 0.0.40
codegen_flags: <defaults>
</compile_context>

<pallas_src>
import jax
import jax.numpy as jnp
from jax.experimental import pallas as pl
from jax.experimental.pallas import tpu as pltpu


_LANE = 128        # lane width (MXU/vreg last-dim granularity)
_SUBLANE = 8       # f32 sublane granularity
_MAX_TILE_B = 65536    # upper bound on batch-tile rows (at K=32 this is ~8 MiB of x)
_MIN_GRID_STEPS = 4    # keep >=4 grid steps so v7x's 2 TCs can both get work


def _cdiv(a, b):
    return (a + b - 1) // b


def _round_up(x, m):
    return ((x + m - 1) // m) * m


def _vmem_limit_bytes():
    """Generation-aware scoped-VMEM limit: ~75% of physical VMEM.

    ~96 MiB on v5e/v6e (128 MiB physical), ~48 MiB on v7x (64 MiB physical).
    Falls back to the v7x-safe value if the hardware query is unavailable.
    """
    phys = 64 * 1024 * 1024
    try:
        cap = getattr(pltpu.get_tpu_info(), "vmem_capacity_bytes", None)
        if cap:
            phys = int(cap)
    except Exception:
        pass
    return (phys * 3) // 4


def _choose_tile_b(B_pad8, K, N, N_pad, vmem_budget):
    """Largest batch tile (multiple of 8) whose double-buffered x/out tiles plus the
    resident (lane-padded) weight/bias fit in the VMEM budget, while keeping at least
    _MIN_GRID_STEPS grid steps for megacore sharding."""
    per_row = 4 * (2 * K + 2 * N)            # f32 x tile + out tile, double-buffered
    fixed = 2 * 4 * (K * N_pad + N_pad)      # W + bias (pessimistically double-buffered)
    tile = (vmem_budget - fixed) // max(per_row, 1)
    step_cap = _round_up(max(_cdiv(B_pad8, _MIN_GRID_STEPS), _SUBLANE), _SUBLANE)
    tile = min(tile, _MAX_TILE_B, step_cap)
    return int(max(_SUBLANE, (tile // _SUBLANE) * _SUBLANE))


def _linear_kernel(x_ref, w_ref, b_ref, o_ref):
    # x_ref: (tile_b, K)   w_ref: (K, N_pad)   b_ref: (1, N)   o_ref: (tile_b, N)
    # MXU matmul in canonical (M,K)x(K,N_pad) form; only the real N columns are
    # written back to HBM (the lane padding never leaves VMEM).
    n = o_ref.shape[-1]
    acc = jnp.dot(x_ref[...], w_ref[...], preferred_element_type=jnp.float32)
    o_ref[...] = (acc[:, :n] + b_ref[...]).astype(o_ref.dtype)


@jax.jit
def linear_regression_forward(x, weight, bias):
    """Forward pass equivalent to nn.Sequential(nn.Linear(K, N))(x).

    Args:
      x:      (B, K) float32
      weight: (N, K) float32   -- PyTorch nn.Linear weight layout
      bias:   (N,)   float32
    Returns:
      (B, N) float32
    """
    B, K = x.shape
    N = weight.shape[0]

    # One-time wrapper-side transpose to MXU-canonical (K, N_pad); the output-feature
    # padding is VMEM-resident only and never written to HBM.
    N_pad = _round_up(N, _LANE)
    w_t = weight.T
    if N_pad != N:
        w_t = jnp.pad(w_t, ((0, 0), (0, N_pad - N)))
    b2d = bias.reshape(1, N)

    # Pad the batch only to the sublane multiple (<= 7 rows). Partial last grid
    # blocks are handled by Pallas (masked stores), so no tile-alignment copy of x.
    B_pad8 = _round_up(B, _SUBLANE)
    if B_pad8 != B:
        x = jnp.pad(x, ((0, B_pad8 - B), (0, 0)))

    vmem_limit = _vmem_limit_bytes()
    tile_b = _choose_tile_b(B_pad8, K, N, N_pad, vmem_limit - 4 * 1024 * 1024)
    grid = (_cdiv(B_pad8, tile_b),)

    out = pl.pallas_call(
        _linear_kernel,
        out_shape=jax.ShapeDtypeStruct((B_pad8, N), x.dtype),
        grid=grid,
        in_specs=[
            pl.BlockSpec((tile_b, K), lambda i: (i, 0)),   # x: tiled over batch
            pl.BlockSpec((K, N_pad), lambda i: (0, 0)),    # W (K, N_pad): resident
            pl.BlockSpec((1, N), lambda i: (0, 0)),        # bias: resident
        ],
        out_specs=pl.BlockSpec((tile_b, N), lambda i: (i, 0)),
        compiler_params=pltpu.CompilerParams(
            dimension_semantics=("parallel",),             # megacore sharding on v7x
            vmem_limit_bytes=int(vmem_limit),
        ),
        cost_estimate=pl.CostEstimate(
            flops=2 * B_pad8 * K * N_pad,
            bytes_accessed=4 * (B_pad8 * K + K * N_pad + B_pad8 * N),
            transcendentals=0,
        ),
    )(x, w_t, b2d)

    if B_pad8 != B:
        out = out[:B]
    return out


if __name__ == "__main__":
    # Small, deterministic example consistent with a linear-regression config:
    # Linear(in_features=32, out_features=1), batch=8.
    key = jax.random.PRNGKey(0)
    k_x, k_w, k_b = jax.random.split(key, 3)

    B, K, N = 8, 32, 1
    x = jax.random.normal(k_x, (B, K), dtype=jnp.float32)
    weight = jax.random.normal(k_w, (N, K), dtype=jnp.float32) * 0.1
    bias = jax.random.normal(k_b, (N,), dtype=jnp.float32) * 0.1

    y = jax.block_until_ready(linear_regression_forward(x, weight, bias))

    # Pure-JAX reference check (same math as torch.nn.Linear).
    y_ref = x @ weight.T + bias
    assert y.shape == (B, N)
    assert jnp.allclose(y, y_ref, atol=1e-5, rtol=1e-5)

    print("KERNEL_OK")
</pallas_src>

<mosaic_0001>
module attributes {stable_mosaic.version = 11 : i64} {
  func.func @_linear_kernel(%arg0: i32, %arg1: memref<8x32xf32, #tpu.memory_space<vmem>>, %arg2: memref<32x128xf32, #tpu.memory_space<vmem>>, %arg3: memref<1x1xf32, #tpu.memory_space<vmem>>, %arg4: memref<8x1xf32, #tpu.memory_space<vmem>>) attributes {dimension_semantics = [#tpu.dimension_semantics<parallel>], iteration_bounds = array<i64: 1>, scalar_prefetch = 0 : i64, scratch_operands = 0 : i64, tpu.core_type = #tpu.core_type<tc>, window_params = [{transform_indices = @transform_0, window_bounds = array<i64: 8, 32>}, {pipeline_mode = #tpu.pipeline_mode<synchronous>, transform_indices = @transform_1, window_bounds = array<i64: 32, 128>}, {pipeline_mode = #tpu.pipeline_mode<synchronous>, transform_indices = @transform_2, window_bounds = array<i64: 1, 1>}, {transform_indices = @transform_3, window_bounds = array<i64: 8, 1>}]} {
    %c0 = arith.constant 0 : index
    %c0_0 = arith.constant 0 : index
    %0 = vector.load %arg1[%c0, %c0_0] : memref<8x32xf32, #tpu.memory_space<vmem>>, vector<8x32xf32>
    %c0_1 = arith.constant 0 : index
    %c0_2 = arith.constant 0 : index
    %1 = vector.load %arg2[%c0_1, %c0_2] : memref<32x128xf32, #tpu.memory_space<vmem>>, vector<32x128xf32>
    %cst = arith.constant dense<0.000000e+00> : vector<8x128xf32>
    %2 = tpu.matmul %0, %1, %cst {dimension_numbers = #tpu.dot_dimension_numbers<[1], [0], [0], [1], [0, 0, 1, 1], [], []>} : vector<8x32xf32>, vector<32x128xf32>, vector<8x128xf32> -> vector<8x128xf32>
    %3 = vector.extract_strided_slice %2 {offsets = [0, 0], sizes = [8, 1], strides = [1, 1]} : vector<8x128xf32> to vector<8x1xf32>
    %c0_3 = arith.constant 0 : index
    %c0_4 = arith.constant 0 : index
    %4 = vector.load %arg3[%c0_3, %c0_4] : memref<1x1xf32, #tpu.memory_space<vmem>>, vector<1x1xf32>
    %5 = vector.broadcast %4 : vector<1x1xf32> to vector<8x1xf32>
    %6 = arith.addf %3, %5 : vector<8x1xf32>
    %c0_5 = arith.constant 0 : index
    %c0_6 = arith.constant 0 : index
    %7 = vector.load %arg4[%c0_5, %c0_6] : memref<8x1xf32, #tpu.memory_space<vmem>>, vector<8x1xf32>
    tpu.vector_store %arg4[%c0_5, %c0_6], %6 {strides = array<i32>} : memref<8x1xf32, #tpu.memory_space<vmem>>, vector<8x1xf32>,
    return
  }
  func.func @transform_0(%arg0: i32) -> (i32, i32) {
    %c0_i32 = arith.constant 0 : i32
    %c0_i32_0 = arith.constant 0 : i32
    return %arg0, %c0_i32 : i32, i32
  }
  func.func @transform_1(%arg0: i32) -> (i32, i32) {
    %c0_i32 = arith.constant 0 : i32
    %c0_i32_0 = arith.constant 0 : i32
    %c0_i32_1 = arith.constant 0 : i32
    return %c0_i32, %c0_i32_0 : i32, i32
  }
  func.func @transform_2(%arg0: i32) -> (i32, i32) {
    %c0_i32 = arith.constant 0 : i32
    %c0_i32_0 = arith.constant 0 : i32
    %c0_i32_1 = arith.constant 0 : i32
    return %c0_i32, %c0_i32_0 : i32, i32
  }
  func.func @transform_3(%arg0: i32) -> (i32, i32) {
    %c0_i32 = arith.constant 0 : i32
    %c0_i32_0 = arith.constant 0 : i32
    return %arg0, %c0_i32 : i32, i32
  }
}

</mosaic_0001>

<llo_original>
// kernel: linear_regression_forward.1
$region0: #{linear_regression_forward.1}
  #allocation0 [shape = 'u32[]', space=smem, size = 0x4, offset = 0x4, fixed_abs, tag = 'smem constant byte address 0x4 - core index']
  #allocation1 [shape = 'u32[144,128]{1,0:T(1,128)}', space=vmem, size = 0x12000, scoped, tag = 'internal scratch']
  #allocation2 [shape = 'f32[1,1]{1,0:T(1,128)S(1)}', space=vmem, size = 0x200, scoped, tag = 'scoped memory for linear_regression_forward.1']
  %s0 = inlined_call_operand.vmem [shape: f32[8,32], index: 0, kind: input, shape index: {}]
  %s1 = inlined_call_operand.vmem [shape: f32[32,128], index: 1, kind: input, shape index: {}]
  %s2 = inlined_call_operand.<no memory space> [shape: f32[1,1], index: 2, kind: input, shape index: {}]
  %s3 = inlined_call_operand.vmem [shape: f32[8,1], index: 3, kind: output, shape index: {}]
  %s4 = sld [smem:[#allocation0]]
  $region22: #{linear_regression_forward.1} parent=0
    _
  %s6 = ssub.s32 1, %s4
  %s7 = scalar_select 0, %s6, %s4
  %v8 = vstv %s2
  %9 = vst [vmem:[#allocation2] sm:$0x1] %v8
  // Predicated region
  $region2: #{linear_regression_forward.1} parent=0 // pred_check
    _
  $region3: #{linear_regression_forward.1} parent=0 // pred_check_branch
    %11 = sbr.rel (0) target = $region5
  $region4: #{linear_regression_forward.1} parent=0 // pred_region
    _
  $region5: #{linear_regression_forward.1} parent=0 // pred_fallthru
    _
  // Predicated region
  $region6: #{linear_regression_forward.1} parent=0 // pred_check
    _
  $region7: #{linear_regression_forward.1} parent=0 // pred_check_branch
    %13 = sbr.rel (0) target = $region9
  $region8: #{linear_regression_forward.1} parent=0 // pred_region
    _
  $region9: #{linear_regression_forward.1} parent=0 // pred_fallthru
    _
  // Predicated region
  $region10: #{linear_regression_forward.1} parent=0 // pred_check
    _
  $region11: #{linear_regression_forward.1} parent=0 // pred_check_branch
    %15 = sbr.rel (0) target = $region13
  $region12: #{linear_regression_forward.1} parent=0 // pred_region
    _
  $region13: #{linear_regression_forward.1} parent=0 // pred_fallthru
    _
  %v16 = vld [vmem:[%s0] sm:$0xff]
  %v17 = vld [vmem:[%s1] sm:$0xff]
  %v18 = vld [vmem:[%s1 + $0x8] sm:$0xff]
  %v19 = vld [vmem:[%s1 + $0x10] sm:$0xff]
  %v20 = vld [vmem:[%s1 + $0x18] sm:$0xff]
  %vm21 = vcmask 261120
  %v23 = vsel %vm21, %v16, 0
  %25 = vmatprep.subr.mxu0 0.0
  %26 = vmatpush1.msra.mxu0 %v17
  %27 = vmatprep.subr.mxu0 0.0
  %28 = vmatpush1.msra.mxu0 %v18
  %29 = vmatprep.subr.mxu0 0.0
  %30 = vmatpush1.msra.mxu0 %v19
  %31 = vmatprep.subr.mxu0 0.0
  %32 = vmatpush1.msra.mxu0 %v20
  %33 = vmatprep.subr.mxu0 0.0
  %34 = vmatpush1.msra.mxu0 0.0
  %35 = vmatprep.subr.mxu0 0.0
  %36 = vmatpush1.msra.mxu0 0.0
  %37 = vmatprep.subr.mxu0 0.0
  %38 = vmatpush1.msra.mxu0 0.0
  %39 = vmatprep.subr.mxu0 0.0
  %40 = vmatpush1.msra.mxu0 0.0
  %41 = vmatprep.subr.mxu0 0.0
  %42 = vmatpush1.msra.mxu0 0.0
  %43 = vmatprep.subr.mxu0 0.0
  %44 = vmatpush1.msra.mxu0 0.0
  %45 = vmatprep.subr.mxu0 0.0
  %46 = vmatpush1.msra.mxu0 0.0
  %47 = vmatprep.subr.mxu0 0.0
  %48 = vmatpush1.msra.mxu0 0.0
  %49 = vmatprep.subr.mxu0 0.0
  %50 = vmatpush1.msra.mxu0 0.0
  %51 = vmatprep.subr.mxu0 0.0
  %52 = vmatpush1.msra.mxu0 0.0
  %53 = vmatprep.subr.mxu0 0.0
  %54 = vmatpush1.msra.mxu0 0.0
  %55 = vmatprep.subr.mxu0 0.0
  %56 = vmatpush1.msra.mxu0 0.0
  %57 = vmatprep.subr.mxu0 0.0
  %58 = vmatpush1.msra.mxu0 0.0
  %59 = vmatprep.subr.mxu0 0.0
  %60 = vmatpush1.msra.mxu0 0.0
  %61 = vmatprep.subr.mxu0 0.0
  %62 = vmatpush1.msra.mxu0 0.0
  %63 = vmatprep.subr.mxu0 0.0
  %64 = vmatpush1.msra.mxu0 0.0
  %65 = vmatprep.subr.mxu0 0.0
  %66 = vmatpush1.msra.mxu0 0.0
  %67 = vmatprep.subr.mxu0 0.0
  %68 = vmatpush1.msra.mxu0 0.0
  %69 = vmatprep.subr.mxu0 0.0
  %70 = vmatpush1.msra.mxu0 0.0
  %71 = vmatprep.subr.mxu0 0.0
  %72 = vmatpush1.msra.mxu0 0.0
  %73 = vmatprep.subr.mxu0 0.0
  %74 = vmatpush1.msra.mxu0 0.0
  %75 = vmatprep.subr.mxu0 0.0
  %76 = vmatpush1.msra.mxu0 0.0
  %77 = vmatprep.subr.mxu0 0.0
  %78 = vmatpush1.msra.mxu0 0.0
  %79 = vmatprep.subr.mxu0 0.0
  %80 = vmatpush1.msra.mxu0 0.0
  %81 = vmatprep.subr.mxu0 0.0
  %82 = vmatpush1.msra.mxu0 0.0
  %83 = vmatprep.subr.mxu0 0.0
  %84 = vmatpush1.msra.mxu0 0.0
  %85 = vmatprep.subr.mxu0 0.0
  %86 = vmatpush1.msra.mxu0 0.0
  %87 = vmatprep.subr.mxu0 0.0
  %88 = vmatpush1.msra.mxu0 0.0
  %89 = vmatprep.mubr.f32.mxu0 0.0
  %90 = vmatmul.mubr.f32.gmra.mrb[0].mxu0 %v23
  %v91 = vpop.f32.mrb[0].mxu0
  %v92 = vadd.f32 0.0, %v91
  %v93 = vpop.f32.mrb[0].mxu0
  %94 = vdwg.mxu0
  %v95 = vld [vmem:[#allocation2] sm:$0x1]
  %v97 = vlaneseq
  %v98 = vshrl.u32 %v97, 7
  %v99 = vsub.s32 0, %v98
  %v100 = vrot.slane %v95, %v99
  %v102 = vadd.f32 %v92, %v100
  %vm103 = vcmask 7168
  %104 = vst.msk [vmem:[%s3] sm:$0xff] %vm103, %v102
  // Predicated region
  $region14: #{linear_regression_forward.1} parent=0 // pred_check
    _
  $region15: #{linear_regression_forward.1} parent=0 // pred_check_branch
    %106 = sbr.rel (0) target = $region17
  $region16: #{linear_regression_forward.1} parent=0 // pred_region
    _
  $region17: #{linear_regression_forward.1} parent=0 // pred_fallthru
    _
  // Predicated region
  $region18: #{linear_regression_forward.1} parent=0 // pred_check
    _
  $region19: #{linear_regression_forward.1} parent=0 // pred_check_branch
    %108 = sbr.rel (0) target = $region21
  $region20: #{linear_regression_forward.1} parent=0 // pred_region
    _
  $region21: #{linear_regression_forward.1} parent=0 // pred_fallthru
    _

</llo_original>
